<compile_context>
chip_gen: v6e
topology: v6e:2x2x1
jax: 0.10.0
libtpu: 0.0.40
codegen_flags: <defaults>
</compile_context>

<pallas_src>
import jax
import jax.numpy as jnp
from jax.experimental import pallas as pl
from jax.experimental.pallas import tpu as pltpu

LANE = 128      # lane width: pad the vocab/output dim to a multiple of this
SUBLANE = 8     # sublane width: pad/tile the batch dim to a multiple of this


def _round_up(x, m):
    return ((x + m - 1) // m) * m


def cbow_kernel(ctx_ref, m_ref, bias_ref, out_ref):
    """One batch tile.

    ctx_ref : (TB, C)  int32, VMEM  -- context token ids
    m_ref   : (Vr, VL) f32,  VMEM   -- fused table, row v = emb[v] @ W^T (padded)
    bias_ref: (1,  VL) f32,  VMEM   -- lane-padded bias
    out_ref : (TB, VL) f32,  VMEM   -- lane-dense output tile (single full store)
    """
    tb, c = ctx_ref.shape
    vr = m_ref.shape[0]

    ctx = ctx_ref[...]                                               # (TB, C) int32
    vocab_iota = jax.lax.broadcasted_iota(jnp.int32, (tb, vr), 1)    # (TB, Vr)

    # One-hot occurrence counts of each vocab id in the context window.
    # C is tiny and static, so a short unrolled loop of (TB, Vr) compares is fine.
    counts = jnp.zeros((tb, vr), jnp.float32)
    for j in range(c):
        tok = ctx[:, j:j + 1]                                        # (TB, 1)
        counts = counts + (tok == vocab_iota).astype(jnp.float32)

    # linear(sum_c emb[ctx]) == counts @ (emb @ W^T) + bias  -- one MXU matmul.
    tile = jnp.dot(counts, m_ref[...], preferred_element_type=jnp.float32)
    out_ref[...] = tile + bias_ref[...]                              # full-tile store


def prepare_fused_params(emb_table, lin_weight, lin_bias):
    """Once-per-weight-update precompute (hoisted off the forward critical path)."""
    V, E = emb_table.shape
    fused = jnp.dot(emb_table, lin_weight.T,
                    preferred_element_type=jnp.float32)              # (V, V)
    v_rows = _round_up(V, SUBLANE)
    v_lanes = _round_up(V, LANE)
    m_pad = jnp.zeros((v_rows, v_lanes), jnp.float32).at[:V, :V].set(fused)
    bias_pad = jnp.zeros((1, v_lanes), jnp.float32).at[0, :V].set(lin_bias)
    return m_pad, bias_pad


def cbow_forward(context, m_pad, bias_pad, vocab_size, *, tile_b=SUBLANE):
    """context: [B, C] int32; m_pad/bias_pad from prepare_fused_params.
    Returns [B, V] float32. tile_b may be raised to 128+ for large batches."""
    B, C = context.shape
    v_rows, v_lanes = m_pad.shape
    tile_b = _round_up(max(tile_b, SUBLANE), SUBLANE)

    bp = _round_up(B, tile_b)                          # batch padded to full tiles
    ctx_pad = jnp.zeros((bp, C), jnp.int32).at[:B].set(context)  # pad rows use token 0

    out_pad = pl.pallas_call(
        cbow_kernel,
        out_shape=jax.ShapeDtypeStruct((bp, v_lanes), jnp.float32),
        grid=(bp // tile_b,),
        in_specs=[
            # Context ids for this batch tile (VMEM, vectorized one-hot build).
            pl.BlockSpec((tile_b, C), lambda i: (i, 0)),
            # Fused table and bias are constant across the grid -> single-buffer
            # them so VMEM isn't wasted on a second copy (matters on v7x).
            pl.BlockSpec((v_rows, v_lanes), lambda i: (0, 0),
                         pipeline_mode=pl.Buffered(1)),
            pl.BlockSpec((1, v_lanes), lambda i: (0, 0),
                         pipeline_mode=pl.Buffered(1)),
        ],
        out_specs=pl.BlockSpec((tile_b, v_lanes), lambda i: (i, 0)),
        compiler_params=pltpu.CompilerParams(
            dimension_semantics=("parallel",)),        # batch tiles shard across TCs
    )(ctx_pad, m_pad, bias_pad)

    return out_pad[:B, :vocab_size]


if __name__ == "__main__":
    # Matches the PyTorch script: vocab = {'word','embeddings','are','awesome'}
    vocab_size = 4
    embed_size = 10
    batch = 16        # 2 batch tiles of 8 -> grid (2,): both v7x TCs participate
    context_len = 4   # CBOW window of 2 on each side

    key = jax.random.PRNGKey(0)
    k_emb, k_w, k_b, k_ctx = jax.random.split(key, 4)

    # Deterministic synthetic parameters (shapes per nn.Embedding / nn.Linear).
    emb_table = jax.random.normal(k_emb, (vocab_size, embed_size), jnp.float32)
    bound = 1.0 / jnp.sqrt(embed_size)
    lin_weight = jax.random.uniform(k_w, (vocab_size, embed_size), jnp.float32,
                                    -bound, bound)
    lin_bias = jax.random.uniform(k_b, (vocab_size,), jnp.float32, -bound, bound)

    context = jax.random.randint(k_ctx, (batch, context_len), 0, vocab_size,
                                 dtype=jnp.int32)

    # Fused params computed once (amortized across forwards / per weight update).
    m_pad, bias_pad = prepare_fused_params(emb_table, lin_weight, lin_bias)

    out = cbow_forward(context, m_pad, bias_pad, vocab_size)
    out = jax.block_until_ready(out)

    # Pure-JAX reference of the PyTorch forward for a sanity check.
    ref = jnp.take(emb_table, context, axis=0).sum(axis=1) @ lin_weight.T + lin_bias
    assert out.shape == (batch, vocab_size)
    assert jnp.allclose(out, ref, atol=1e-5, rtol=1e-5)

    print("KERNEL_OK")
</pallas_src>

<mosaic_0001>
module attributes {stable_mosaic.version = 11 : i64} {
  func.func @cbow_kernel(%arg0: i32, %arg1: memref<8x4xi32, #tpu.memory_space<vmem>>, %arg2: memref<8x128xf32, #tpu.memory_space<vmem>>, %arg3: memref<1x128xf32, #tpu.memory_space<vmem>>, %arg4: memref<8x128xf32, #tpu.memory_space<vmem>>) attributes {dimension_semantics = [#tpu.dimension_semantics<parallel>], iteration_bounds = array<i64: 2>, scalar_prefetch = 0 : i64, scratch_operands = 0 : i64, tpu.core_type = #tpu.core_type<tc>, window_params = [{transform_indices = @transform_0, window_bounds = array<i64: 8, 4>}, {pipeline_mode = #tpu.pipeline_mode<synchronous>, transform_indices = @transform_1, window_bounds = array<i64: 8, 128>}, {pipeline_mode = #tpu.pipeline_mode<synchronous>, transform_indices = @transform_2, window_bounds = array<i64: 1, 128>}, {transform_indices = @transform_3, window_bounds = array<i64: 8, 128>}]} {
    %c0 = arith.constant 0 : index
    %c0_0 = arith.constant 0 : index
    %0 = vector.load %arg1[%c0, %c0_0] : memref<8x4xi32, #tpu.memory_space<vmem>>, vector<8x4xi32>
    %1 = tpu.iota {dimensions = array<i32: 1>} : vector<8x8xi32>
    %cst = arith.constant 0.000000e+00 : f32
    %2 = vector.broadcast %cst : f32 to vector<8x8xf32>
    %3 = vector.extract_strided_slice %0 {offsets = [0, 0], sizes = [8, 1], strides = [1, 1]} : vector<8x4xi32> to vector<8x1xi32>
    %4 = vector.broadcast %3 : vector<8x1xi32> to vector<8x8xi32>
    %5 = arith.cmpi eq, %4, %1 : vector<8x8xi32>
    %6 = arith.extui %5 : vector<8x8xi1> to vector<8x8xi32>
    %7 = arith.sitofp %6 : vector<8x8xi32> to vector<8x8xf32>
    %8 = arith.addf %2, %7 : vector<8x8xf32>
    %9 = vector.extract_strided_slice %0 {offsets = [0, 1], sizes = [8, 1], strides = [1, 1]} : vector<8x4xi32> to vector<8x1xi32>
    %10 = vector.broadcast %9 : vector<8x1xi32> to vector<8x8xi32>
    %11 = arith.cmpi eq, %10, %1 : vector<8x8xi32>
    %12 = arith.extui %11 : vector<8x8xi1> to vector<8x8xi32>
    %13 = arith.sitofp %12 : vector<8x8xi32> to vector<8x8xf32>
    %14 = arith.addf %8, %13 : vector<8x8xf32>
    %15 = vector.extract_strided_slice %0 {offsets = [0, 2], sizes = [8, 1], strides = [1, 1]} : vector<8x4xi32> to vector<8x1xi32>
    %16 = vector.broadcast %15 : vector<8x1xi32> to vector<8x8xi32>
    %17 = arith.cmpi eq, %16, %1 : vector<8x8xi32>
    %18 = arith.extui %17 : vector<8x8xi1> to vector<8x8xi32>
    %19 = arith.sitofp %18 : vector<8x8xi32> to vector<8x8xf32>
    %20 = arith.addf %14, %19 : vector<8x8xf32>
    %21 = vector.extract_strided_slice %0 {offsets = [0, 3], sizes = [8, 1], strides = [1, 1]} : vector<8x4xi32> to vector<8x1xi32>
    %22 = vector.broadcast %21 : vector<8x1xi32> to vector<8x8xi32>
    %23 = arith.cmpi eq, %22, %1 : vector<8x8xi32>
    %24 = arith.extui %23 : vector<8x8xi1> to vector<8x8xi32>
    %25 = arith.sitofp %24 : vector<8x8xi32> to vector<8x8xf32>
    %26 = arith.addf %20, %25 : vector<8x8xf32>
    %c0_1 = arith.constant 0 : index
    %c0_2 = arith.constant 0 : index
    %27 = vector.load %arg2[%c0_1, %c0_2] : memref<8x128xf32, #tpu.memory_space<vmem>>, vector<8x128xf32>
    %cst_3 = arith.constant dense<0.000000e+00> : vector<8x128xf32>
    %28 = tpu.matmul %26, %27, %cst_3 {dimension_numbers = #tpu.dot_dimension_numbers<[1], [0], [0], [1], [0, 0, 1, 1], [], []>} : vector<8x8xf32>, vector<8x128xf32>, vector<8x128xf32> -> vector<8x128xf32>
    %c0_4 = arith.constant 0 : index
    %c0_5 = arith.constant 0 : index
    %29 = vector.load %arg3[%c0_4, %c0_5] : memref<1x128xf32, #tpu.memory_space<vmem>>, vector<1x128xf32>
    %30 = vector.broadcast %29 : vector<1x128xf32> to vector<8x128xf32>
    %31 = arith.addf %28, %30 : vector<8x128xf32>
    %c0_6 = arith.constant 0 : index
    %c0_7 = arith.constant 0 : index
    %32 = vector.load %arg4[%c0_6, %c0_7] : memref<8x128xf32, #tpu.memory_space<vmem>>, vector<8x128xf32>
    tpu.vector_store %arg4[%c0_6, %c0_7], %31 {strides = array<i32>} : memref<8x128xf32, #tpu.memory_space<vmem>>, vector<8x128xf32>,
    return
  }
  func.func @transform_0(%arg0: i32) -> (i32, i32) {
    %c0_i32 = arith.constant 0 : i32
    %c0_i32_0 = arith.constant 0 : i32
    return %arg0, %c0_i32 : i32, i32
  }
  func.func @transform_1(%arg0: i32) -> (i32, i32) {
    %c0_i32 = arith.constant 0 : i32
    %c0_i32_0 = arith.constant 0 : i32
    %c0_i32_1 = arith.constant 0 : i32
    return %c0_i32, %c0_i32_0 : i32, i32
  }
  func.func @transform_2(%arg0: i32) -> (i32, i32) {
    %c0_i32 = arith.constant 0 : i32
    %c0_i32_0 = arith.constant 0 : i32
    %c0_i32_1 = arith.constant 0 : i32
    return %c0_i32, %c0_i32_0 : i32, i32
  }
  func.func @transform_3(%arg0: i32) -> (i32, i32) {
    %c0_i32 = arith.constant 0 : i32
    %c0_i32_0 = arith.constant 0 : i32
    return %arg0, %c0_i32 : i32, i32
  }
}

</mosaic_0001>

<llo_original>
// kernel: tpu_custom_call.1
$region0: #{tpu_custom_call.1}
  #allocation0 [shape = 'u32[]', space=smem, size = 0x4, offset = 0x4, fixed_abs, tag = 'smem constant byte address 0x4 - core index']
  #allocation1 [shape = 'u32[144,128]{1,0:T(1,128)}', space=vmem, size = 0x12000, scoped, tag = 'internal scratch']
  %s0 = inlined_call_operand.vmem [shape: s32[16,4], index: 0, kind: input, shape index: {}]
  %s1 = inlined_call_operand.vmem [shape: f32[8,128], index: 1, kind: input, shape index: {}]
  %s2 = inlined_call_operand.vmem [shape: f32[1,128], index: 2, kind: input, shape index: {}]
  %s3 = inlined_call_operand.hbm [shape: f32[16,128], index: 3, kind: output, shape index: {}]
  %s4 = sld [smem:[#allocation0]]
  $region45: #{tpu_custom_call.1} parent=0
    _
  %s6 = ssub.s32 1, %s4
  %s7 = scalar_select 0, %s6, %s4
  $region1: #{tpu_custom_call.1} parent=0
    #allocation2 [shape = 'u8[8192]{0}', space=vmem, size = 0x2000, scoped, tag = 'output window, operand 0']
    #allocation3 [shape = 's32[2]{0}', space=sflag, size = 0x8, scoped, tag = 'scoped memory for tpu_custom_call.1']
    %8 = vsyncpa [#allocation3], 0
    %s9 = scalar_lea.sflag [#allocation3], 1
    %10 = vsyncpa %s9, 0
    loop: start=0, step=1, limit=4
    $region2: #{tpu_custom_call.1} parent=1 // loop_pre_header
      _
    $region3: #{tpu_custom_call.1} parent=1 // loop_header
      %s12 = sphi 0, %s16
      %p13 = scmp.ge.s32.totalorder %s12, 4
      %s22 = sphi 0, %s24
      %s25 = sphi 0, %s22
      %s26 = sphi 0, %s25
      %s42 = sphi 0, %s26
      %s46 = sphi 0, %s46
      %s48 = sphi 0, %s46
      %s49 = sphi 0, %s48
      %s63 = sphi 0, %s49
      %s67 = sphi 0, %s67
      %s69 = sphi 0, %s67
      %s70 = sphi 0, %s69
      %s84 = sphi 0, %s70
      %s90 = sphi 0, %s92
      %s93 = sphi 0, %s90
      %s94 = sphi 0, %s93
      %s110 = sphi 0, %s94
    $region4: #{tpu_custom_call.1} parent=1 // loop_header_branch
      %15 = sbr.rel (%p13) target = $region8
    $region5: #{tpu_custom_call.1} parent=1 // loop_body
      %s17 = ssub.s32 %s12, 1
      %s18 = ssub.s32 %s12, 2
      %s19 = sadd.s32 %s12, 1
      %s20 = ssub.s32 %s12, %s19
      %p21 = scmp.eq.s32.totalorder %s20, 0
      %s23 = sadd.s32 %s22, 1
      %s24 = scalar_select %p21, %s22, %s23
      %p27 = pneg %p21
      %p28 = scmp.eq.s32.totalorder %s12, 1
      %p29 = por %p27, %p28
      %p30 = scmp.ne.s32.totalorder %s22, %s25
      %p31 = scmp.eq.s32.totalorder %s12, 0
      %p32 = por %p30, %p31
      %p33 = scmp.ne.s32.totalorder %s22, %s25
      %p34 = scmp.eq.s32.totalorder %s17, 1
      %p35 = por %p33, %p34
      %p36 = scmp.ne.s32.totalorder %s25, %s26
      %p37 = scmp.eq.s32.totalorder %s17, 0
      %p38 = por %p36, %p37
      %p39 = scmp.ne.s32.totalorder %s25, %s26
      %p40 = scmp.eq.s32.totalorder %s18, 1
      %p41 = por %p39, %p40
      %p43 = scmp.ne.s32.totalorder %s26, %s42
      %p44 = scmp.eq.s32.totalorder %s18, 0
      %p45 = por %p43, %p44
      %s47 = sadd.s32 %s46, 1
      %p50 = scmp.eq.s32.totalorder %s12, 1
      %p51 = scmp.ne.s32.totalorder %s46, %s48
      %p52 = scmp.eq.s32.totalorder %s12, 0
      %p53 = por %p51, %p52
      %p54 = scmp.ne.s32.totalorder %s46, %s48
      %p55 = scmp.eq.s32.totalorder %s17, 1
      %p56 = por %p54, %p55
      %p57 = scmp.ne.s32.totalorder %s48, %s49
      %p58 = scmp.eq.s32.totalorder %s17, 0
      %p59 = por %p57, %p58
      %p60 = scmp.ne.s32.totalorder %s48, %s49
      %p61 = scmp.eq.s32.totalorder %s18, 1
      %p62 = por %p60, %p61
      %p64 = scmp.ne.s32.totalorder %s49, %s63
      %p65 = scmp.eq.s32.totalorder %s18, 0
      %p66 = por %p64, %p65
      %s68 = sadd.s32 %s67, 1
      %p71 = scmp.eq.s32.totalorder %s12, 1
      %p72 = scmp.ne.s32.totalorder %s67, %s69
      %p73 = scmp.eq.s32.totalorder %s12, 0
      %p74 = por %p72, %p73
      %p75 = scmp.ne.s32.totalorder %s67, %s69
      %p76 = scmp.eq.s32.totalorder %s17, 1
      %p77 = por %p75, %p76
      %p78 = scmp.ne.s32.totalorder %s69, %s70
      %p79 = scmp.eq.s32.totalorder %s17, 0
      %p80 = por %p78, %p79
      %p81 = scmp.ne.s32.totalorder %s69, %s70
      %p82 = scmp.eq.s32.totalorder %s18, 1
      %p83 = por %p81, %p82
      %p85 = scmp.ne.s32.totalorder %s70, %s84
      %p86 = scmp.eq.s32.totalorder %s18, 0
      %p87 = por %p85, %p86
      %s88 = ssub.s32 %s12, %s19
      %p89 = scmp.eq.s32.totalorder %s88, 0
      %s91 = sadd.s32 %s90, 1
      %s92 = scalar_select %p89, %s90, %s91
      %p95 = pneg %p89
      %p96 = scmp.eq.s32.totalorder %s12, 1
      %p97 = por %p95, %p96
      %p98 = scmp.ne.s32.totalorder %s90, %s93
      %p99 = scmp.eq.s32.totalorder %s12, 0
      %p100 = por %p98, %p99
      %p101 = scmp.ne.s32.totalorder %s90, %s93
      %p102 = scmp.eq.s32.totalorder %s17, 1
      %p103 = por %p101, %p102
      %p104 = scmp.ne.s32.totalorder %s93, %s94
      %p105 = scmp.eq.s32.totalorder %s17, 0
      %p106 = por %p104, %p105
      %p107 = scmp.ne.s32.totalorder %s93, %s94
      %p108 = scmp.eq.s32.totalorder %s18, 1
      %p109 = por %p107, %p108
      %p111 = scmp.ne.s32.totalorder %s94, %s110
      %p112 = scmp.eq.s32.totalorder %s18, 0
      %p113 = por %p111, %p112
      %p114 = scmp.le.s32.totalorder 1, %s12
      %p115 = scmp.lt.s32.totalorder %s12, 3
      %p116 = pnand %p114, %p115
      %p117 = pneg %p116
      // Predicated region
      $region9: #{tpu_custom_call.1} parent=5 // pred_check
        _
      $region10: #{tpu_custom_call.1} parent=5 // pred_check_branch
        %119 = sbr.rel (%p116) target = $region12
      $region11: #{tpu_custom_call.1} parent=5 // pred_region
        %s120 = ssub.s32 %s12, 1
        // Predicated region
        $region13: #{tpu_custom_call.1} parent=11 // pred_check
          %p121 = pneg %p59
        $region14: #{tpu_custom_call.1} parent=11 // pred_check_branch
          %123 = sbr.rel (%p121) target = $region16
        $region15: #{tpu_custom_call.1} parent=11 // pred_region
          _
        $region16: #{tpu_custom_call.1} parent=11 // pred_fallthru
          _
        // Predicated region
        $region17: #{tpu_custom_call.1} parent=11 // pred_check
          %p124 = pneg %p80
        $region18: #{tpu_custom_call.1} parent=11 // pred_check_branch
          %126 = sbr.rel (%p124) target = $region20
        $region19: #{tpu_custom_call.1} parent=11 // pred_region
          _
        $region20: #{tpu_custom_call.1} parent=11 // pred_fallthru
          _
      $region12: #{tpu_custom_call.1} parent=5 // pred_fallthru
        _
      %p127 = scmp.lt.s32.totalorder %s12, 2
      // Predicated region
      $region21: #{tpu_custom_call.1} parent=5 // pred_check
        %p128 = pneg %p127
      $region22: #{tpu_custom_call.1} parent=5 // pred_check_branch
        %130 = sbr.rel (%p128) target = $region24
      $region23: #{tpu_custom_call.1} parent=5 // pred_region
        // Predicated region
        $region25: #{tpu_custom_call.1} parent=23 // pred_check
          %p131 = pneg %p32
        $region26: #{tpu_custom_call.1} parent=23 // pred_check_branch
          %133 = sbr.rel (%p131) target = $region28
        $region27: #{tpu_custom_call.1} parent=23 // pred_region
          %p134 = scmp.lt.s32.totalorder %s12, 1
          %s135 = scalar_select %p134, %s12, 1
          %s136 = smul.addr %s135, 8
          %s137 = scalar_lea.vmem %s0, %s136
        $region28: #{tpu_custom_call.1} parent=23 // pred_fallthru
          _
      $region24: #{tpu_custom_call.1} parent=5 // pred_fallthru
        _
      %p138 = scmp.le.s32.totalorder 1, %s12
      %p139 = scmp.lt.s32.totalorder %s12, 3
      %p140 = pnand %p138, %p139
      %p141 = pneg %p140
      // Predicated region
      $region29: #{tpu_custom_call.1} parent=5 // pred_check
        _
      $region30: #{tpu_custom_call.1} parent=5 // pred_check_branch
        %143 = sbr.rel (%p140) target = $region32
      $region31: #{tpu_custom_call.1} parent=5 // pred_region
        %s144 = ssub.s32 %s12, 1
        %p145 = scmp.lt.s32.totalorder %s17, 1
        %s146 = scalar_select %p145, %s17, 1
        %s147 = smul.addr %s146, 8
        %s148 = scalar_lea.vmem %s0, %s147
        %p149 = pneg %p38
        %p150 = pneg %p35
        %p151 = pneg %p59
        %p152 = pneg %p56
        %p153 = pneg %p80
        %p154 = pneg %p77
        %p155 = pneg %p106
        %p156 = pneg %p103
        %s157 = sand.u32 %s93, 1
        %s158 = scalar_lea.sflag [#allocation3], %s157
        %s159 = sand.u32 %s93, 1
        %s160 = smul.addr %s159, 8
        %s161 = scalar_lea.vmem [#allocation2], %s160
        %p162 = scmp.lt.s32.totalorder %s17, 1
        %s163 = scalar_select %p162, %s17, 1
        %s164 = smul.addr %s163, 8
        %s165 = scalar_lea.vmem %s0, %s164
        %v166 = vld [vmem:[%s165] sm:$0xff]
        %v167 = vlaneseq
        %v168 = vand.u32 %v167, 127
        %169 = vset.pattern.permute.xlu0 0
        %170 = vperm.xlu0 %169, %v166
        %v171 = vpop.permute.xlu0 %170
        %vm172 = vcmp.eq.s32.totalorder %v171, %v168
        %v173 = vsel %vm172, 1, 0
        %v174 = vcvt.s32.f32 %v173
        %v175 = vadd.f32 %v174, 0.0
        %176 = vset.pattern.permute.xlu0 1
        %177 = vperm.xlu0 %176, %v166
        %v178 = vpop.permute.xlu0 %177
        %vm179 = vcmp.eq.s32.totalorder %v178, %v168
        %v180 = vsel %vm179, 1, 0
        %v181 = vcvt.s32.f32 %v180
        %v182 = vadd.f32 %v175, %v181
        %183 = vset.pattern.permute.xlu0 2
        %184 = vperm.xlu0 %183, %v166
        %v185 = vpop.permute.xlu0 %184
        %vm186 = vcmp.eq.s32.totalorder %v185, %v168
        %v187 = vsel %vm186, 1, 0
        %v188 = vcvt.s32.f32 %v187
        %v189 = vadd.f32 %v182, %v188
        %190 = vset.pattern.permute.xlu0 3
        %191 = vperm.xlu0 %190, %v166
        %v192 = vpop.permute.xlu0 %191
        %vm193 = vcmp.eq.s32.totalorder %v192, %v168
        %v194 = vsel %vm193, 1, 0
        %v195 = vcvt.s32.f32 %v194
        %v196 = vadd.f32 %v189, %v195
        %v197 = vld [vmem:[%s1] sm:$0xff]
        %v198 = vld [vmem:[%s2] sm:$0x1]
        %v200 = vlaneseq
        %v201 = vshrl.u32 %v200, 7
        %v202 = vsub.s32 0, %v201
        %v203 = vrot.slane %v198, %v202
        %vm205 = vcmask 64512
        %v207 = vsel %vm205, %v196, 0
        %209 = vmatprep.subr.mxu0 0.0
        %210 = vmatpush1.msra.mxu0 0.0
        %211 = vmatprep.subr.mxu0 0.0
        %212 = vmatpush1.msra.mxu0 0.0
        %213 = vmatprep.subr.mxu0 0.0
        %214 = vmatpush1.msra.mxu0 0.0
        %215 = vmatprep.subr.mxu0 0.0
        %216 = vmatpush1.msra.mxu0 0.0
        %217 = vmatprep.subr.mxu0 0.0
        %218 = vmatpush1.msra.mxu0 0.0
        %219 = vmatprep.subr.mxu0 0.0
        %220 = vmatpush1.msra.mxu0 0.0
        %221 = vmatprep.subr.mxu0 0.0
        %222 = vmatpush1.msra.mxu0 0.0
        %223 = vmatprep.subr.mxu0 0.0
        %224 = vmatpush1.msra.mxu0 0.0
        %225 = vmatprep.subr.mxu0 0.0
        %226 = vmatpush1.msra.mxu0 0.0
        %227 = vmatprep.subr.mxu0 0.0
        %228 = vmatpush1.msra.mxu0 0.0
        %229 = vmatprep.subr.mxu0 0.0
        %230 = vmatpush1.msra.mxu0 0.0
        %231 = vmatprep.subr.mxu0 0.0
        %232 = vmatpush1.msra.mxu0 0.0
        %233 = vmatprep.subr.mxu0 0.0
        %234 = vmatpush1.msra.mxu0 0.0
        %235 = vmatprep.subr.mxu0 0.0
        %236 = vmatpush1.msra.mxu0 0.0
        %237 = vmatprep.subr.mxu0 0.0
        %238 = vmatpush1.msra.mxu0 0.0
        %239 = vmatprep.subr.mxu0 0.0
        %240 = vmatpush1.msra.mxu0 %v197
        %241 = vmatprep.subr.mxu0 0.0
        %242 = vmatpush2.msra.mxu0 0.0
        %243 = vmatprep.subr.mxu0 0.0
        %244 = vmatpush2.msra.mxu0 0.0
        %245 = vmatprep.subr.mxu0 0.0
        %246 = vmatpush2.msra.mxu0 0.0
        %247 = vmatprep.subr.mxu0 0.0
        %248 = vmatpush2.msra.mxu0 0.0
        %249 = vmatprep.subr.mxu0 0.0
        %250 = vmatpush2.msra.mxu0 0.0
        %251 = vmatprep.subr.mxu0 0.0
        %252 = vmatpush2.msra.mxu0 0.0
        %253 = vmatprep.subr.mxu0 0.0
        %254 = vmatpush2.msra.mxu0 0.0
        %255 = vmatprep.subr.mxu0 0.0
        %256 = vmatpush2.msra.mxu0 0.0
        %257 = vmatprep.subr.mxu0 0.0
        %258 = vmatpush2.msra.mxu0 0.0
        %259 = vmatprep.subr.mxu0 0.0
        %260 = vmatpush2.msra.mxu0 0.0
        %261 = vmatprep.subr.mxu0 0.0
        %262 = vmatpush2.msra.mxu0 0.0
        %263 = vmatprep.subr.mxu0 0.0
        %264 = vmatpush2.msra.mxu0 0.0
        %265 = vmatprep.subr.mxu0 0.0
        %266 = vmatpush2.msra.mxu0 0.0
        %267 = vmatprep.subr.mxu0 0.0
        %268 = vmatpush2.msra.mxu0 0.0
        %269 = vmatprep.subr.mxu0 0.0
        %270 = vmatpush2.msra.mxu0 0.0
        %271 = vmatprep.subr.mxu0 0.0
        %272 = vmatpush2.msra.mxu0 0.0
        %273 = vmatprep.mubr.f32.mxu0 0.0
        %274 = vmatmul.mubr.f32.gmra.mxu0 %v207
        %v275 = vpop.f32.mrf.mxu0
        %v276 = vadd.f32 %v203, %v275
        %v277 = vpop.f32.mrf.mxu0
        %278 = vdwg.mxu0
        %279 = vst [vmem:[%s161] sm:$0xff] %v276
        %s280 = sand.u32 %s93, 1
        %s281 = scalar_lea.sflag [#allocation3], %s280
        %s282 = sand.u32 %s93, 1
        %s283 = smul.addr %s282, 8
        %s284 = scalar_lea.vmem [#allocation2], %s283
        // Predicated region
        $region33: #{tpu_custom_call.1} parent=31 // pred_check
          %p285 = pneg %p103
        $region34: #{tpu_custom_call.1} parent=31 // pred_check_branch
          %287 = sbr.rel (%p285) target = $region36
        $region35: #{tpu_custom_call.1} parent=31 // pred_region
          %s289 = ssub.s32 128, 128
          %290 = vsyncadd %s281, %s289
          %s291 = smul.addr %s17, 128
          %s292 = scalar_lea.hbm %s3, %s291
          %s294 = sshll.u32 %s284, 4
          %s295 = int_to_ptr.vmem [resolvable:$true] %s294
          %297 = dma.vmem_to_hbm [thread:$0]  %s295, 128, %s292, %s281
        $region36: #{tpu_custom_call.1} parent=31 // pred_fallthru
          _
      $region32: #{tpu_custom_call.1} parent=5 // pred_fallthru
        _
      %p298 = scmp.le.s32.totalorder 2, %s12
      // Predicated region
      $region37: #{tpu_custom_call.1} parent=5 // pred_check
        %p299 = pneg %p298
      $region38: #{tpu_custom_call.1} parent=5 // pred_check_branch
        %301 = sbr.rel (%p299) target = $region40
      $region39: #{tpu_custom_call.1} parent=5 // pred_region
        %s302 = ssub.s32 %s12, 2
        // Predicated region
        $region41: #{tpu_custom_call.1} parent=39 // pred_check
          %p303 = pneg %p109
        $region42: #{tpu_custom_call.1} parent=39 // pred_check_branch
          %305 = sbr.rel (%p303) target = $region44
        $region43: #{tpu_custom_call.1} parent=39 // pred_region
          %s306 = sand.u32 %s94, 1
          %s307 = scalar_lea.sflag [#allocation3], %s306
          %s308 = sand.u32 %s94, 1
          %s309 = smul.addr %s308, 8
          %s310 = scalar_lea.vmem [#allocation2], %s309
          %311 = dma.done %s307, 128
        $region44: #{tpu_custom_call.1} parent=39 // pred_fallthru
          _
      $region40: #{tpu_custom_call.1} parent=5 // pred_fallthru
        _
    $region6: #{tpu_custom_call.1} parent=1 // loop_footer
      %s16 = sadd.s32 1, %s12
    $region7: #{tpu_custom_call.1} parent=1 // loop_footer_branch
      %11 = sbr.rel target = $region3
    $region8: #{tpu_custom_call.1} parent=1 // loop_exit
      _
    %312 = vsyncpa [#allocation3], 1
    %s313 = scalar_lea.sflag [#allocation3], 1
    %314 = vsyncpa %s313, 1

</llo_original>
